<compile_context>
chip_gen: v5e
topology: v5e:2x2
jax: 0.10.0
libtpu: 0.0.40
codegen_flags: <defaults>
</compile_context>

<pallas_src>
import functools

import jax
import jax.numpy as jnp
from jax.experimental import pallas as pl
from jax.experimental.pallas import tpu as pltpu


_LANE = 128
_BLOCK_ELEMS = 1 << 20   # elements per input per grid step (4 MiB f32, 2 MiB bf16)


def _bce_partial_kernel(o_ref, t_ref, out_ref, acc_ref, *,
                        neg_inv_n, tm, cols, acc_rows, rows,
                        tiles_per_core, mask_rows):
    c = pl.program_id(0)          # TensorCore split (parallel axis)
    i = pl.program_id(1)          # reduction steps for this core (arbitrary axis)

    @pl.when(i == 0)
    def _():
        acc_ref[...] = jnp.zeros_like(acc_ref)

    o = o_ref[...].astype(jnp.float32)
    t = t_ref[...].astype(jnp.float32)

    # torch.nn.BCELoss clamps both log terms at -100 for numerical stability.
    log_o = jnp.maximum(jnp.log(o), -100.0)
    log_1mo = jnp.maximum(jnp.log1p(-o), -100.0)
    # t*log(o) + (1-t)*log(1-o), rewritten with one fewer mul/sub (VPU trim);
    # the overall negation is folded into neg_inv_n at finalize time.
    per_elem = log_1mo + t * (log_o - log_1mo)

    if mask_rows:
        # Ragged last tile (and the clamped duplicate tile of an odd core split):
        # drop rows past the logical end; jnp.where also drops any NaN produced
        # from out-of-bounds garbage in the block.
        start_row = (c * tiles_per_core + i) * tm
        row_ids = start_row + jax.lax.broadcasted_iota(jnp.int32, (tm, cols), 0)
        per_elem = jnp.where(row_ids < rows, per_elem, 0.0)

    # Per-lane/sublane partials: VPU-only adds; the single cross-lane/sublane XLU
    # reduce happens once per core in the finalize branch below.
    if acc_rows > 1:
        acc_ref[...] += per_elem.reshape(tm // acc_rows, acc_rows, cols).sum(axis=0)
    else:
        acc_ref[...] += per_elem.sum(axis=0, keepdims=True)

    @pl.when(i == pl.num_programs(1) - 1)
    def _():
        total = jnp.sum(acc_ref[...]) * neg_inv_n      # -sum / n for this core's slice
        # Lane-dense unmasked store; wrapper reads element (0, 0) of each core block.
        out_ref[...] = jnp.broadcast_to(total, out_ref.shape)


def _bce_loss_ref(outputs, targets):
    """Pure-JAX reference matching torch.nn.BCELoss(reduction='mean')."""
    o = outputs.astype(jnp.float32)
    t = targets.astype(jnp.float32)
    log_o = jnp.maximum(jnp.log(o), -100.0)
    log_1mo = jnp.maximum(jnp.log1p(-o), -100.0)
    return -jnp.mean(t * log_o + (1.0 - t) * log_1mo)


def bce_loss(outputs: jax.Array, targets: jax.Array) -> jax.Array:
    """BCELoss (mean reduction) via a tiled, pipelined Pallas TPU kernel.

    Pass inputs in their storage dtype (e.g. bfloat16) — the kernel upcasts
    in-register, so narrower inputs directly reduce HBM traffic.
    """
    assert outputs.shape == targets.shape
    n = int(outputs.size)
    if n == 0:
        # torch.nn.BCELoss(reduction='mean') on empty input yields NaN (0/0).
        return jnp.array(jnp.nan, dtype=jnp.float32)

    flat_o = outputs.reshape(-1)
    flat_t = targets.reshape(-1)

    # Widest lane-dense width that divides n -> zero-copy reshape (no padding).
    cols = next((c for c in (512, 256, 128) if n % c == 0), None)
    if cols is None:
        # TODO(synk): fully copy-free ragged layout for n % 128 != 0; for now a
        # single <128-element zero pad. Zero-padded elements (o=0, t=0) contribute
        # exactly 0 to the sum; the mean still divides by the original n.
        cols = _LANE
        pad = (-n) % cols
        flat_o = jnp.pad(flat_o, (0, pad))
        flat_t = jnp.pad(flat_t, (0, pad))

    rows = (n + cols - 1) // cols
    o2 = flat_o.reshape(rows, cols)
    t2 = flat_t.reshape(rows, cols)

    tm_full = max(32, _BLOCK_ELEMS // cols)   # multiple of 32: valid tile for f32/bf16/i8
    if rows <= tm_full:
        tm, num_tiles = rows, 1               # single block == full array dims
    else:
        tm, num_tiles = tm_full, pl.cdiv(rows, tm_full)   # ragged last tile masked

    # Shard the reduction across the 2 TensorCores on v7x; serial no-op on v5e/v6e.
    splits = 2 if num_tiles >= 2 else 1
    tiles_per_core = pl.cdiv(num_tiles, splits)
    mask_rows = (rows % tm != 0) or (splits * tiles_per_core != num_tiles)

    acc_rows = 8 if tm % 8 == 0 else 1        # (8, cols) VPU accumulator when possible

    def in_index_map(c, i):
        # Clamp so the DMA never walks past the array; the duplicated tile of an
        # odd split is fully zeroed by the in-kernel row mask.
        return (jnp.minimum(c * tiles_per_core + i, num_tiles - 1), 0)

    kernel = functools.partial(
        _bce_partial_kernel,
        neg_inv_n=-1.0 / n, tm=tm, cols=cols, acc_rows=acc_rows, rows=rows,
        tiles_per_core=tiles_per_core, mask_rows=mask_rows)

    in_bytes = rows * cols * (o2.dtype.itemsize + t2.dtype.itemsize)
    cost = pl.CostEstimate(flops=8 * n, transcendentals=2 * n,
                           bytes_accessed=in_bytes + splits * 8 * 128 * 4)

    partials = pl.pallas_call(
        kernel,
        out_shape=jax.ShapeDtypeStruct((8 * splits, 128), jnp.float32),
        grid_spec=pltpu.PrefetchScalarGridSpec(
            num_scalar_prefetch=0,
            grid=(splits, tiles_per_core),
            in_specs=[
                pl.BlockSpec((tm, cols), in_index_map),
                pl.BlockSpec((tm, cols), in_index_map),
            ],
            out_specs=pl.BlockSpec((8, 128), lambda c, i: (c, 0)),
            scratch_shapes=[pltpu.VMEM((acc_rows, cols), jnp.float32)],
        ),
        compiler_params=pltpu.CompilerParams(
            # Axis 0: per-core partials (megacore). Axis 1: serial reduction over
            # the shared per-core accumulator.
            dimension_semantics=("parallel", "arbitrary"),
            vmem_limit_bytes=32 * 1024 * 1024,
        ),
        cost_estimate=cost,
    )(o2, t2)

    # One partial per core (each 8x128 block is a broadcast of that core's scalar).
    return jnp.sum(partials[::8, 0])


if __name__ == "__main__":
    key = jax.random.PRNGKey(0)
    k1, k2, k3, k4, k5, k6 = jax.random.split(key, 6)

    # 1) Small shape consistent with the module (batch=2, hidden=32): exercises the
    #    sub-128 pad path + single-tile path.
    B, H = 2, 32
    outputs = jax.nn.sigmoid(jax.random.normal(k1, (B, H), dtype=jnp.float32))
    targets = (jax.random.uniform(k2, (B, H)) > 0.5).astype(jnp.float32)
    loss = bce_loss(outputs, targets)
    jax.block_until_ready(loss)
    ref = _bce_loss_ref(outputs, targets)
    assert jnp.allclose(loss, ref, rtol=1e-5, atol=1e-6), (loss, ref)

    # 2) Zero-copy lane-dense single-tile case (n % 512 == 0, rows <= TM).
    outputs2 = jax.nn.sigmoid(jax.random.normal(k3, (256, 1024), dtype=jnp.float32))
    targets2 = (jax.random.uniform(k4, (256, 1024)) > 0.5).astype(jnp.float32)
    loss2 = bce_loss(outputs2, targets2)
    jax.block_until_ready(loss2)
    ref2 = _bce_loss_ref(outputs2, targets2)
    assert jnp.allclose(loss2, ref2, rtol=1e-4, atol=1e-6), (loss2, ref2)

    # 3) Multi-tile + 2-core split + ragged last tile (in-kernel row mask).
    outputs3 = jax.nn.sigmoid(jax.random.normal(k5, (1536, 1024), dtype=jnp.float32))
    targets3 = (jax.random.uniform(k6, (1536, 1024)) > 0.5).astype(jnp.float32)
    loss3 = bce_loss(outputs3, targets3)
    jax.block_until_ready(loss3)
    ref3 = _bce_loss_ref(outputs3, targets3)
    assert jnp.allclose(loss3, ref3, rtol=1e-4, atol=1e-6), (loss3, ref3)

    print("KERNEL_OK")
</pallas_src>

<mosaic_0001>
module attributes {stable_mosaic.version = 11 : i64} {
  func.func @_bce_partial_kernel(%arg0: i32, %arg1: i32, %arg2: memref<1x128xf32, #tpu.memory_space<vmem>>, %arg3: memref<1x128xf32, #tpu.memory_space<vmem>>, %arg4: memref<8x128xf32, #tpu.memory_space<vmem>>, %arg5: memref<1x128xf32, #tpu.memory_space<vmem>>) attributes {dimension_semantics = [#tpu.dimension_semantics<parallel>, #tpu.dimension_semantics<arbitrary>], iteration_bounds = array<i64: 1, 1>, scalar_prefetch = 0 : i64, scratch_operands = 1 : i64, tpu.core_type = #tpu.core_type<tc>, window_params = [{transform_indices = @transform_0, window_bounds = array<i64: 1, 128>}, {transform_indices = @transform_1, window_bounds = array<i64: 1, 128>}, {transform_indices = @transform_2, window_bounds = array<i64: 8, 128>}]} {
    %c0_i32 = arith.constant 0 : i32
    %0 = arith.cmpi eq, %arg1, %c0_i32 : i32
    %1 = arith.extui %0 : i1 to i32
    %c0_i32_0 = arith.constant 0 : i32
    %2 = arith.cmpi ne, %1, %c0_i32_0 : i32
    scf.if %2 {
      %cst_13 = arith.constant 0.000000e+00 : f32
      %24 = vector.broadcast %cst_13 : f32 to vector<1x128xf32>
      %c0_14 = arith.constant 0 : index
      %c0_15 = arith.constant 0 : index
      %25 = vector.load %arg5[%c0_14, %c0_15] : memref<1x128xf32, #tpu.memory_space<vmem>>, vector<1x128xf32>
      tpu.vector_store %arg5[%c0_14, %c0_15], %24 {strides = array<i32>} : memref<1x128xf32, #tpu.memory_space<vmem>>, vector<1x128xf32>,
    } else {
    }
    %c0 = arith.constant 0 : index
    %c0_1 = arith.constant 0 : index
    %3 = vector.load %arg2[%c0, %c0_1] : memref<1x128xf32, #tpu.memory_space<vmem>>, vector<1x128xf32>
    %c0_2 = arith.constant 0 : index
    %c0_3 = arith.constant 0 : index
    %4 = vector.load %arg3[%c0_2, %c0_3] : memref<1x128xf32, #tpu.memory_space<vmem>>, vector<1x128xf32>
    %5 = math.log %3 : vector<1x128xf32>
    %cst = arith.constant -1.000000e+02 : f32
    %6 = vector.broadcast %cst : f32 to vector<1x128xf32>
    %7 = arith.maximumf %5, %6 : vector<1x128xf32>
    %cst_4 = arith.constant 0.000000e+00 : f32
    %8 = vector.broadcast %cst_4 : f32 to vector<1x128xf32>
    %9 = arith.subf %8, %3 : vector<1x128xf32>
    %10 = math.log1p %9 : vector<1x128xf32>
    %cst_5 = arith.constant -1.000000e+02 : f32
    %11 = vector.broadcast %cst_5 : f32 to vector<1x128xf32>
    %12 = arith.maximumf %10, %11 : vector<1x128xf32>
    %13 = arith.subf %7, %12 : vector<1x128xf32>
    %14 = arith.mulf %4, %13 : vector<1x128xf32>
    %15 = arith.addf %12, %14 : vector<1x128xf32>
    %c0_6 = arith.constant 0 : index
    %c0_7 = arith.constant 0 : index
    %16 = vector.load %arg5[%c0_6, %c0_7] : memref<1x128xf32, #tpu.memory_space<vmem>>, vector<1x128xf32>
    %cst_8 = arith.constant dense<0.000000e+00> : vector<128xf32>
    %17 = vector.multi_reduction <add>, %15, %cst_8 [0] : vector<1x128xf32> to vector<128xf32>
    %18 = vector.shape_cast %17 : vector<128xf32> to vector<1x128xf32>
    %19 = arith.addf %16, %18 : vector<1x128xf32>
    %c0_9 = arith.constant 0 : index
    %c0_10 = arith.constant 0 : index
    %20 = vector.load %arg5[%c0_9, %c0_10] : memref<1x128xf32, #tpu.memory_space<vmem>>, vector<1x128xf32>
    tpu.vector_store %arg5[%c0_9, %c0_10], %19 {strides = array<i32>} : memref<1x128xf32, #tpu.memory_space<vmem>>, vector<1x128xf32>,
    %c0_i32_11 = arith.constant 0 : i32
    %21 = arith.cmpi eq, %arg1, %c0_i32_11 : i32
    %22 = arith.extui %21 : i1 to i32
    %c0_i32_12 = arith.constant 0 : i32
    %23 = arith.cmpi ne, %22, %c0_i32_12 : i32
    scf.if %23 {
      %c0_13 = arith.constant 0 : index
      %c0_14 = arith.constant 0 : index
      %24 = vector.load %arg5[%c0_13, %c0_14] : memref<1x128xf32, #tpu.memory_space<vmem>>, vector<1x128xf32>
      %25 = vector.shape_cast %24 : vector<1x128xf32> to vector<1x1x128xf32>
      %cst_15 = arith.constant dense<0.000000e+00> : vector<1xf32>
      %26 = vector.multi_reduction <add>, %25, %cst_15 [1, 2] : vector<1x1x128xf32> to vector<1xf32>
      %27 = vector.shape_cast %26 : vector<1xf32> to vector<1x1x1xf32>
      %28 = vector.extract %27[0, 0, 0] : f32 from vector<1x1x1xf32>
      %cst_16 = arith.constant -1.562500e-02 : f32
      %29 = arith.mulf %28, %cst_16 : f32
      %30 = vector.broadcast %29 : f32 to vector<8x128xf32>
      %c0_17 = arith.constant 0 : index
      %c0_18 = arith.constant 0 : index
      %31 = vector.load %arg4[%c0_17, %c0_18] : memref<8x128xf32, #tpu.memory_space<vmem>>, vector<8x128xf32>
      tpu.vector_store %arg4[%c0_17, %c0_18], %30 {strides = array<i32>} : memref<8x128xf32, #tpu.memory_space<vmem>>, vector<8x128xf32>,
    } else {
    }
    return
  }
  func.func @transform_0(%arg0: i32, %arg1: i32) -> (i32, i32) {
    %c1_i32 = arith.constant 1 : i32
    %0 = arith.muli %arg0, %c1_i32 : i32
    %1 = arith.addi %0, %arg1 : i32
    %c0_i32 = arith.constant 0 : i32
    %2 = arith.minsi %1, %c0_i32 : i32
    %c0_i32_0 = arith.constant 0 : i32
    %c0_i32_1 = arith.constant 0 : i32
    return %2, %c0_i32_0 : i32, i32
  }
  func.func @transform_1(%arg0: i32, %arg1: i32) -> (i32, i32) {
    %c1_i32 = arith.constant 1 : i32
    %0 = arith.muli %arg0, %c1_i32 : i32
    %1 = arith.addi %0, %arg1 : i32
    %c0_i32 = arith.constant 0 : i32
    %2 = arith.minsi %1, %c0_i32 : i32
    %c0_i32_0 = arith.constant 0 : i32
    %c0_i32_1 = arith.constant 0 : i32
    return %2, %c0_i32_0 : i32, i32
  }
  func.func @transform_2(%arg0: i32, %arg1: i32) -> (i32, i32) {
    %c0_i32 = arith.constant 0 : i32
    %c0_i32_0 = arith.constant 0 : i32
    return %arg0, %c0_i32 : i32, i32
  }
}

</mosaic_0001>

<llo_original>
// kernel: tpu_custom_call.1
$region0: #{tpu_custom_call.1}
  #allocation0 [shape = 'u32[]', space=smem, size = 0x4, offset = 0x4, fixed_abs, tag = 'smem constant byte address 0x4 - core index']
  #allocation1 [shape = 'u32[72,128]{1,0:T(1,128)}', space=vmem, size = 0x9000, scoped, tag = 'internal scratch']
  #allocation2 [shape = 'f32[1,128]{1,0:T(1,128)}', space=vmem, size = 0x200, scoped, tag = 'scratch operand']
  %s0 = inlined_call_operand.hbm [shape: f32[1,128], index: 0, kind: input, shape index: {}]
  %s1 = inlined_call_operand.hbm [shape: f32[1,128], index: 1, kind: input, shape index: {}]
  %s2 = inlined_call_operand.hbm [shape: f32[8,128], index: 2, kind: output, shape index: {}]
  %s3 = sld [smem:[#allocation0]]
  $region34: #{tpu_custom_call.1} parent=0
    _
  %s5 = ssub.s32 1, %s3
  %s6 = scalar_select 0, %s5, %s3
  $region1: #{tpu_custom_call.1} parent=0
    #allocation3 [shape = 'u8[512]{0}', space=vmem, size = 0x400, scoped, tag = 'input window, operand 0, single buffered']
    #allocation4 [shape = 's32[1]{0}', space=sflag, size = 0x4, scoped, tag = 'scoped memory for tpu_custom_call.1']
    #allocation5 [shape = 's32[1]{0}', space=sflag, size = 0x4, scoped, tag = 'scoped memory for tpu_custom_call.1']
    #allocation6 [shape = 'u8[512]{0}', space=vmem, size = 0x400, scoped, tag = 'input window, operand 1, single buffered']
    #allocation7 [shape = 's32[1]{0}', space=sflag, size = 0x4, scoped, tag = 'scoped memory for tpu_custom_call.1']
    #allocation8 [shape = 'u8[4096]{0}', space=vmem, size = 0x1000, scoped, tag = 'output window, operand 0, single buffered']
    %7 = vsyncpa [#allocation4], 0
    %8 = vsyncpa [#allocation7], 0
    %9 = vsyncpa [#allocation5], 0
    // Predicated region
    $region2: #{tpu_custom_call.1} parent=1 // pred_check
      _
    $region3: #{tpu_custom_call.1} parent=1 // pred_check_branch
      %11 = sbr.rel (0) target = $region5
    $region4: #{tpu_custom_call.1} parent=1 // pred_region
      %s12 = sadd.s32 0, 0
      %p13 = scmp.lt.s32.totalorder %s12, 0
      %s14 = scalar_select %p13, %s12, 0
      %16 = vsyncadd [#allocation4], 0
      %s17 = scalar_lea.hbm %s0, %s14
      %s19 = sshll.u32 %s17, 4
      %s20 = int_to_ptr.hbm [resolvable:$true] %s19
      %s21 = sshll.u32 [#allocation3], 4
      %s22 = int_to_ptr.vmem [resolvable:$true] %s21
      %24 = dma.hbm_to_vmem [thread:$0]  %s20, 16, %s22, [#allocation4]
    $region5: #{tpu_custom_call.1} parent=1 // pred_fallthru
      _
    // Predicated region
    $region6: #{tpu_custom_call.1} parent=1 // pred_check
      _
    $region7: #{tpu_custom_call.1} parent=1 // pred_check_branch
      %26 = sbr.rel (0) target = $region9
    $region8: #{tpu_custom_call.1} parent=1 // pred_region
      %s27 = sadd.s32 0, 0
      %p28 = scmp.lt.s32.totalorder %s27, 0
      %s29 = scalar_select %p28, %s27, 0
      %31 = vsyncadd [#allocation7], 0
      %s32 = scalar_lea.hbm %s1, %s29
      %s34 = sshll.u32 %s32, 4
      %s35 = int_to_ptr.hbm [resolvable:$true] %s34
      %s36 = sshll.u32 [#allocation6], 4
      %s37 = int_to_ptr.vmem [resolvable:$true] %s36
      %39 = dma.hbm_to_vmem [thread:$0]  %s35, 16, %s37, [#allocation7]
    $region9: #{tpu_custom_call.1} parent=1 // pred_fallthru
      _
    // Predicated region
    $region10: #{tpu_custom_call.1} parent=1 // pred_check
      _
    $region11: #{tpu_custom_call.1} parent=1 // pred_check_branch
      %41 = sbr.rel (0) target = $region13
    $region12: #{tpu_custom_call.1} parent=1 // pred_region
      %43 = dma.done [#allocation4], 16
    $region13: #{tpu_custom_call.1} parent=1 // pred_fallthru
      _
    // Predicated region
    $region14: #{tpu_custom_call.1} parent=1 // pred_check
      _
    $region15: #{tpu_custom_call.1} parent=1 // pred_check_branch
      %45 = sbr.rel (0) target = $region17
    $region16: #{tpu_custom_call.1} parent=1 // pred_region
      %47 = dma.done [#allocation7], 16
    $region17: #{tpu_custom_call.1} parent=1 // pred_fallthru
      _
    %s48 = sadd.s32 0, 0
    %p49 = scmp.lt.s32.totalorder %s48, 0
    %s50 = scalar_select %p49, %s48, 0
    %s51 = sadd.s32 0, 0
    %p52 = scmp.lt.s32.totalorder %s51, 0
    %s53 = scalar_select %p52, %s51, 0
    %p54 = scmp.eq.s32.totalorder 0, 0
    // Predicated region
    $region18: #{tpu_custom_call.1} parent=1 // pred_check
      %p55 = pneg %p54
    $region19: #{tpu_custom_call.1} parent=1 // pred_check_branch
      %57 = sbr.rel (%p55) target = $region21
    $region20: #{tpu_custom_call.1} parent=1 // pred_region
      %58 = vst [vmem:[#allocation2] sm:$0x1] 0.0
    $region21: #{tpu_custom_call.1} parent=1 // pred_fallthru
      _
    %v59 = vld [vmem:[#allocation3] sm:$0x1]
    %v60 = vld [vmem:[#allocation6] sm:$0x1]
    %v61 = vlog2.pop %v59
    %v62 = vmul.f32 %v61, 0.6931472
    %v63 = vmax.f32 %v62, -100.0
    %v64 = vsub.f32 0.0, %v59
    %v65 = vadd.f32 %v64, 1.0
    %v66 = vlog2.pop %v65
    %v67 = vmul.f32 %v66, 0.6931472
    %v68 = vmul.f32 -0.5, %v64
    %v69 = vadd.f32 %v68, 1.0
    %v70 = vmul.f32 %v69, %v64
    %v71 = vand.u32 2147483647, %v64
    %vm72 = vcmp.lt.f32.partialorder %v71, 0.0004427343
    %v73 = vsel %vm72, %v70, %v67
    %v74 = vmax.f32 %v73, -100.0
    %v75 = vsub.f32 %v63, %v74
    %v76 = vmul.f32 %v60, %v75
    %v77 = vadd.f32 %v74, %v76
    %v78 = vld [vmem:[#allocation2] sm:$0x1]
    %v79 = vadd.f32 %v77, 0.0
    %v80 = vadd.f32 %v78, %v79
    %81 = vst [vmem:[#allocation2] sm:$0x1] %v80
    // Predicated region
    $region22: #{tpu_custom_call.1} parent=1 // pred_check
      %p82 = pneg %p54
    $region23: #{tpu_custom_call.1} parent=1 // pred_check_branch
      %84 = sbr.rel (%p82) target = $region25
    $region24: #{tpu_custom_call.1} parent=1 // pred_region
      %v85 = vld [vmem:[#allocation2] sm:$0x1]
      %vm86 = vcmask 1040384
      %v87 = vsel %vm86, %v85, 0.0
      %88 = vadd.xlane.f32.xlu0 %v87
      %v89 = vpop.xlane.xlu0 %88
      %v90 = vrot.slane %v89, 4
      %v91 = vadd.f32 %v89, %v90
      %v92 = vrot.slane %v91, 2
      %v93 = vadd.f32 %v91, %v92
      %v94 = vrot.slane %v93, 1
      %v95 = vadd.f32 %v93, %v94
      %s96 = vtos %v95
      %s97 = smul.f32 %s96, -0.015625
      %v98 = vstv %s97
      %99 = vst [vmem:[#allocation8] sm:$0xff] %v98
    $region25: #{tpu_custom_call.1} parent=1 // pred_fallthru
      _
    // Predicated region
    $region26: #{tpu_custom_call.1} parent=1 // pred_check
      _
    $region27: #{tpu_custom_call.1} parent=1 // pred_check_branch
      %101 = sbr.rel (0) target = $region29
    $region28: #{tpu_custom_call.1} parent=1 // pred_region
      %103 = vsyncadd [#allocation5], 0
      %s105 = sshll.u32 [#allocation8], 4
      %s106 = int_to_ptr.vmem [resolvable:$true] %s105
      %s107 = sshll.u32 %s2, 4
      %s108 = int_to_ptr.hbm [resolvable:$true] %s107
      %110 = dma.vmem_to_hbm [thread:$0]  %s106, 128, %s108, [#allocation5]
    $region29: #{tpu_custom_call.1} parent=1 // pred_fallthru
      _
    // Predicated region
    $region30: #{tpu_custom_call.1} parent=1 // pred_check
      _
    $region31: #{tpu_custom_call.1} parent=1 // pred_check_branch
      %112 = sbr.rel (0) target = $region33
    $region32: #{tpu_custom_call.1} parent=1 // pred_region
      %114 = dma.done [#allocation5], 128
    $region33: #{tpu_custom_call.1} parent=1 // pred_fallthru
      _
    %115 = vsyncpa [#allocation4], 1
    %116 = vsyncpa [#allocation7], 1
    %117 = vsyncpa [#allocation5], 1

</llo_original>
